<compile_context>
chip_gen: v6e
topology: v6e:2x2x1
jax: 0.10.0
libtpu: 0.0.40
codegen_flags: <defaults>
</compile_context>

<pallas_src>
import functools

import jax
import jax.numpy as jnp
from jax.experimental import pallas as pl
from jax.experimental.pallas import tpu as pltpu


def _celog_kernel(x_ref, y_ref, o_ref, row_acc_ref, *, n_rows, neg_inv_n):
    i = pl.program_id(0)          # row-tile index
    j = pl.program_id(1)          # class-tile index (reduction axis, last)
    nj = pl.num_programs(1)

    tm, tc = x_ref.shape

    @pl.when(jnp.logical_and(i == 0, j == 0))
    def _init_total():
        o_ref[...] = jnp.zeros_like(o_ref)

    @pl.when(j == 0)
    def _init_rows():
        row_acc_ref[...] = jnp.zeros_like(row_acc_ref)

    # One-hot select of x[r, y[r]] within this class tile (pure VPU work).
    x = x_ref[...].astype(jnp.float32)                            # (tm, tc)
    labels = y_ref[...]                                           # (tm, 1) int32
    col = jax.lax.broadcasted_iota(jnp.int32, (tm, tc), 1) + j * tc
    hit = col == labels                                           # exact one-hot per row
    row_acc_ref[...] += jnp.sum(jnp.where(hit, x, 0.0), axis=-1, keepdims=True)

    # After the last class tile: log only the picked probabilities (TM of them).
    @pl.when(j == nj - 1)
    def _finish_rows():
        row = jax.lax.broadcasted_iota(jnp.int32, (tm, 1), 0) + i * tm
        picked = jnp.where(row < n_rows, row_acc_ref[...], 1.0)   # pad rows -> log(1)=0
        o_ref[...] += jnp.sum(jnp.log(picked), keepdims=True)

    @pl.when(jnp.logical_and(i == pl.num_programs(0) - 1, j == nj - 1))
    def _finalize():
        o_ref[...] = o_ref[...] * neg_inv_n                       # mean: single multiply


def celog(x, y, *, tm_max=512, tc_max=1024):
    """x: (N, C) probabilities (f32 or bf16); y: (N,) int class indices -> scalar f32."""
    n, c = x.shape
    # Block dims must be a multiple of (8, 128) or equal the full array dim.
    tm = n if n <= tm_max else tm_max          # tm_max is a multiple of 8
    tc = c if c <= tc_max else tc_max          # tc_max is a multiple of 128
    grid = (pl.cdiv(n, tm), pl.cdiv(c, tc))
    y2d = y.astype(jnp.int32).reshape(n, 1)

    kernel = functools.partial(_celog_kernel, n_rows=n, neg_inv_n=-1.0 / n)
    out = pl.pallas_call(
        kernel,
        out_shape=jax.ShapeDtypeStruct((1, 1), jnp.float32),
        grid_spec=pltpu.PrefetchScalarGridSpec(
            num_scalar_prefetch=0,
            grid=grid,
            in_specs=[
                pl.BlockSpec((tm, tc), lambda i, j: (i, j)),   # x tile, streamed
                pl.BlockSpec((tm, 1), lambda i, j: (i, 0)),    # labels for this row tile
            ],
            out_specs=pl.BlockSpec((1, 1), lambda i, j: (0, 0)),
            scratch_shapes=[pltpu.VMEM((tm, 1), jnp.float32)],  # per-row picked prob
        ),
        compiler_params=pltpu.CompilerParams(
            # The scalar output accumulates across BOTH grid axes, so both must
            # be "arbitrary" (sequential).
            dimension_semantics=("arbitrary", "arbitrary"),
        ),
    )(x, y2d)
    return out[0, 0]


if __name__ == "__main__":
    key = jax.random.PRNGKey(0)
    kx, ky, kx2, ky2 = jax.random.split(key, 4)

    # Primary small shape (single tile).
    N, C = 8, 32
    logits = jax.random.normal(kx, (N, C), dtype=jnp.float32)
    x = jax.nn.softmax(logits, axis=-1)        # valid probabilities for log()
    y = jax.random.randint(ky, (N,), 0, C, dtype=jnp.int32)

    loss = celog(x, y)
    jax.block_until_ready(loss)
    ref = -jnp.mean(jnp.log(x)[jnp.arange(N), y])
    assert jnp.allclose(loss, ref, atol=1e-5, rtol=1e-5), (loss, ref)

    # Exercise the tiled/streamed path: multi-tile grid with remainder rows and
    # remainder classes (forced small tiles).
    N2, C2 = 20, 200
    x2 = jax.nn.softmax(jax.random.normal(kx2, (N2, C2), dtype=jnp.float32), axis=-1)
    y2 = jax.random.randint(ky2, (N2,), 0, C2, dtype=jnp.int32)
    loss2 = celog(x2, y2, tm_max=8, tc_max=128)
    jax.block_until_ready(loss2)
    ref2 = -jnp.mean(jnp.log(x2)[jnp.arange(N2), y2])
    assert jnp.allclose(loss2, ref2, atol=1e-5, rtol=1e-5), (loss2, ref2)

    print("KERNEL_OK")
</pallas_src>

<mosaic_0001>
module attributes {stable_mosaic.version = 11 : i64} {
  func.func @_celog_kernel(%arg0: i32, %arg1: i32, %arg2: memref<8x32xf32, #tpu.memory_space<vmem>>, %arg3: memref<8x1xi32, #tpu.memory_space<vmem>>, %arg4: memref<1x1xf32, #tpu.memory_space<vmem>>, %arg5: memref<8x1xf32, #tpu.memory_space<vmem>>) attributes {dimension_semantics = [#tpu.dimension_semantics<arbitrary>, #tpu.dimension_semantics<arbitrary>], iteration_bounds = array<i64: 1, 1>, scalar_prefetch = 0 : i64, scratch_operands = 1 : i64, tpu.core_type = #tpu.core_type<tc>, window_params = [{transform_indices = @transform_0, window_bounds = array<i64: 8, 32>}, {transform_indices = @transform_1, window_bounds = array<i64: 8, 1>}, {pipeline_mode = #tpu.pipeline_mode<synchronous>, transform_indices = @transform_2, window_bounds = array<i64: 1, 1>}]} {
    %c0_i32 = arith.constant 0 : i32
    %0 = arith.cmpi eq, %arg0, %c0_i32 : i32
    %c0_i32_0 = arith.constant 0 : i32
    %1 = arith.cmpi eq, %arg1, %c0_i32_0 : i32
    %2 = arith.andi %0, %1 : i1
    %3 = arith.extui %2 : i1 to i32
    %c0_i32_1 = arith.constant 0 : i32
    %4 = arith.cmpi ne, %3, %c0_i32_1 : i32
    scf.if %4 {
      %cst_17 = arith.constant 0.000000e+00 : f32
      %31 = vector.broadcast %cst_17 : f32 to vector<1x1xf32>
      %c0_18 = arith.constant 0 : index
      %c0_19 = arith.constant 0 : index
      %32 = vector.load %arg4[%c0_18, %c0_19] : memref<1x1xf32, #tpu.memory_space<vmem>>, vector<1x1xf32>
      tpu.vector_store %arg4[%c0_18, %c0_19], %31 {strides = array<i32>} : memref<1x1xf32, #tpu.memory_space<vmem>>, vector<1x1xf32>,
    } else {
    }
    %c0_i32_2 = arith.constant 0 : i32
    %5 = arith.cmpi eq, %arg1, %c0_i32_2 : i32
    %6 = arith.extui %5 : i1 to i32
    %c0_i32_3 = arith.constant 0 : i32
    %7 = arith.cmpi ne, %6, %c0_i32_3 : i32
    scf.if %7 {
      %cst_17 = arith.constant 0.000000e+00 : f32
      %31 = vector.broadcast %cst_17 : f32 to vector<8x1xf32>
      %c0_18 = arith.constant 0 : index
      %c0_19 = arith.constant 0 : index
      %32 = vector.load %arg5[%c0_18, %c0_19] : memref<8x1xf32, #tpu.memory_space<vmem>>, vector<8x1xf32>
      tpu.vector_store %arg5[%c0_18, %c0_19], %31 {strides = array<i32>} : memref<8x1xf32, #tpu.memory_space<vmem>>, vector<8x1xf32>,
    } else {
    }
    %c0 = arith.constant 0 : index
    %c0_4 = arith.constant 0 : index
    %8 = vector.load %arg2[%c0, %c0_4] : memref<8x32xf32, #tpu.memory_space<vmem>>, vector<8x32xf32>
    %c0_5 = arith.constant 0 : index
    %c0_6 = arith.constant 0 : index
    %9 = vector.load %arg3[%c0_5, %c0_6] : memref<8x1xi32, #tpu.memory_space<vmem>>, vector<8x1xi32>
    %10 = tpu.iota {dimensions = array<i32: 1>} : vector<8x32xi32>
    %c32_i32 = arith.constant 32 : i32
    %11 = arith.muli %arg1, %c32_i32 : i32
    %12 = vector.broadcast %11 : i32 to vector<8x32xi32>
    %13 = arith.addi %10, %12 : vector<8x32xi32>
    %14 = vector.broadcast %9 : vector<8x1xi32> to vector<8x32xi32>
    %15 = arith.cmpi eq, %13, %14 : vector<8x32xi32>
    %c0_7 = arith.constant 0 : index
    %c0_8 = arith.constant 0 : index
    %16 = vector.load %arg5[%c0_7, %c0_8] : memref<8x1xf32, #tpu.memory_space<vmem>>, vector<8x1xf32>
    %cst = arith.constant 0.000000e+00 : f32
    %17 = vector.broadcast %cst : f32 to vector<8x32xf32>
    %18 = arith.select %15, %8, %17 : vector<8x32xi1>, vector<8x32xf32>
    %cst_9 = arith.constant dense<0.000000e+00> : vector<8xf32>
    %19 = vector.multi_reduction <add>, %18, %cst_9 [1] : vector<8x32xf32> to vector<8xf32>
    %20 = vector.shape_cast %19 : vector<8xf32> to vector<8x1xf32>
    %21 = arith.addf %16, %20 : vector<8x1xf32>
    %c0_10 = arith.constant 0 : index
    %c0_11 = arith.constant 0 : index
    %22 = vector.load %arg5[%c0_10, %c0_11] : memref<8x1xf32, #tpu.memory_space<vmem>>, vector<8x1xf32>
    tpu.vector_store %arg5[%c0_10, %c0_11], %21 {strides = array<i32>} : memref<8x1xf32, #tpu.memory_space<vmem>>, vector<8x1xf32>,
    %c0_i32_12 = arith.constant 0 : i32
    %23 = arith.cmpi eq, %arg1, %c0_i32_12 : i32
    %24 = arith.extui %23 : i1 to i32
    %c0_i32_13 = arith.constant 0 : i32
    %25 = arith.cmpi ne, %24, %c0_i32_13 : i32
    scf.if %25 {
      %31 = tpu.iota {dimensions = array<i32: 0>} : vector<8x1xi32>
      %c8_i32 = arith.constant 8 : i32
      %32 = arith.muli %arg0, %c8_i32 : i32
      %33 = vector.broadcast %32 : i32 to vector<8x1xi32>
      %34 = arith.addi %31, %33 : vector<8x1xi32>
      %c8_i32_17 = arith.constant 8 : i32
      %35 = vector.broadcast %c8_i32_17 : i32 to vector<8x1xi32>
      %36 = arith.cmpi slt, %34, %35 : vector<8x1xi32>
      %c0_18 = arith.constant 0 : index
      %c0_19 = arith.constant 0 : index
      %37 = vector.load %arg5[%c0_18, %c0_19] : memref<8x1xf32, #tpu.memory_space<vmem>>, vector<8x1xf32>
      %cst_20 = arith.constant 1.000000e+00 : f32
      %38 = vector.broadcast %cst_20 : f32 to vector<8x1xf32>
      %39 = arith.select %36, %37, %38 : vector<8x1xi1>, vector<8x1xf32>
      %c0_21 = arith.constant 0 : index
      %c0_22 = arith.constant 0 : index
      %40 = vector.load %arg4[%c0_21, %c0_22] : memref<1x1xf32, #tpu.memory_space<vmem>>, vector<1x1xf32>
      %41 = math.log %39 : vector<8x1xf32>
      %42 = vector.shape_cast %41 : vector<8x1xf32> to vector<1x8x1xf32>
      %cst_23 = arith.constant dense<0.000000e+00> : vector<1xf32>
      %43 = vector.multi_reduction <add>, %42, %cst_23 [1, 2] : vector<1x8x1xf32> to vector<1xf32>
      %44 = vector.shape_cast %43 : vector<1xf32> to vector<1x1x1xf32>
      %45 = vector.extract %44[0, 0, 0] : f32 from vector<1x1x1xf32>
      %46 = vector.broadcast %45 : f32 to vector<1x1xf32>
      %47 = arith.addf %40, %46 : vector<1x1xf32>
      %c0_24 = arith.constant 0 : index
      %c0_25 = arith.constant 0 : index
      %48 = vector.load %arg4[%c0_24, %c0_25] : memref<1x1xf32, #tpu.memory_space<vmem>>, vector<1x1xf32>
      tpu.vector_store %arg4[%c0_24, %c0_25], %47 {strides = array<i32>} : memref<1x1xf32, #tpu.memory_space<vmem>>, vector<1x1xf32>,
    } else {
    }
    %c0_i32_14 = arith.constant 0 : i32
    %26 = arith.cmpi eq, %arg0, %c0_i32_14 : i32
    %c0_i32_15 = arith.constant 0 : i32
    %27 = arith.cmpi eq, %arg1, %c0_i32_15 : i32
    %28 = arith.andi %26, %27 : i1
    %29 = arith.extui %28 : i1 to i32
    %c0_i32_16 = arith.constant 0 : i32
    %30 = arith.cmpi ne, %29, %c0_i32_16 : i32
    scf.if %30 {
      %c0_17 = arith.constant 0 : index
      %c0_18 = arith.constant 0 : index
      %31 = vector.load %arg4[%c0_17, %c0_18] : memref<1x1xf32, #tpu.memory_space<vmem>>, vector<1x1xf32>
      %cst_19 = arith.constant -1.250000e-01 : f32
      %32 = vector.broadcast %cst_19 : f32 to vector<1x1xf32>
      %33 = arith.mulf %31, %32 : vector<1x1xf32>
      %c0_20 = arith.constant 0 : index
      %c0_21 = arith.constant 0 : index
      %34 = vector.load %arg4[%c0_20, %c0_21] : memref<1x1xf32, #tpu.memory_space<vmem>>, vector<1x1xf32>
      tpu.vector_store %arg4[%c0_20, %c0_21], %33 {strides = array<i32>} : memref<1x1xf32, #tpu.memory_space<vmem>>, vector<1x1xf32>,
    } else {
    }
    return
  }
  func.func @transform_0(%arg0: i32, %arg1: i32) -> (i32, i32) {
    %c0_i32 = arith.constant 0 : i32
    return %arg0, %arg1 : i32, i32
  }
  func.func @transform_1(%arg0: i32, %arg1: i32) -> (i32, i32) {
    %c0_i32 = arith.constant 0 : i32
    %c0_i32_0 = arith.constant 0 : i32
    return %arg0, %c0_i32 : i32, i32
  }
  func.func @transform_2(%arg0: i32, %arg1: i32) -> (i32, i32) {
    %c0_i32 = arith.constant 0 : i32
    %c0_i32_0 = arith.constant 0 : i32
    %c0_i32_1 = arith.constant 0 : i32
    return %c0_i32, %c0_i32_0 : i32, i32
  }
}

</mosaic_0001>

<llo_original>
// kernel: tpu_custom_call.1
$region0: #{tpu_custom_call.1}
  #allocation0 [shape = 'u32[]', space=smem, size = 0x4, offset = 0x4, fixed_abs, tag = 'smem constant byte address 0x4 - core index']
  #allocation1 [shape = 'u32[144,128]{1,0:T(1,128)}', space=vmem, size = 0x12000, scoped, tag = 'internal scratch']
  #allocation2 [shape = 'f32[8,1]{1,0:T(8,128)}', space=vmem, size = 0x1000, scoped, tag = 'scratch operand']
  %s0 = inlined_call_operand.vmem [shape: f32[8,32], index: 0, kind: input, shape index: {}]
  %s1 = inlined_call_operand.vmem [shape: s32[8,1], index: 1, kind: input, shape index: {}]
  %s2 = inlined_call_operand.hbm [shape: f32[1,1], index: 2, kind: output, shape index: {}]
  %s3 = sld [smem:[#allocation0]]
  $region34: #{tpu_custom_call.1} parent=0
    _
  %s5 = ssub.s32 1, %s3
  %s6 = scalar_select 0, %s5, %s3
  $region1: #{tpu_custom_call.1} parent=0
    #allocation3 [shape = 'u8[512]{0}', space=vmem, size = 0x400, scoped, tag = 'output window, operand 0, single buffered']
    #allocation4 [shape = 's32[1]{0}', space=sflag, size = 0x4, scoped, tag = 'scoped memory for tpu_custom_call.1']
    %7 = vsyncpa [#allocation4], 0
    // Predicated region
    $region2: #{tpu_custom_call.1} parent=1 // pred_check
      _
    $region3: #{tpu_custom_call.1} parent=1 // pred_check_branch
      %9 = sbr.rel (0) target = $region5
    $region4: #{tpu_custom_call.1} parent=1 // pred_region
      _
    $region5: #{tpu_custom_call.1} parent=1 // pred_fallthru
      _
    // Predicated region
    $region6: #{tpu_custom_call.1} parent=1 // pred_check
      _
    $region7: #{tpu_custom_call.1} parent=1 // pred_check_branch
      %11 = sbr.rel (0) target = $region9
    $region8: #{tpu_custom_call.1} parent=1 // pred_region
      _
    $region9: #{tpu_custom_call.1} parent=1 // pred_fallthru
      _
    %p12 = scmp.eq.s32.totalorder 0, 0
    %p13 = scmp.eq.s32.totalorder 0, 0
    %p14 = pnand %p12, %p13
    %p15 = pneg %p14
    // Predicated region
    $region10: #{tpu_custom_call.1} parent=1 // pred_check
      _
    $region11: #{tpu_custom_call.1} parent=1 // pred_check_branch
      %17 = sbr.rel (%p14) target = $region13
    $region12: #{tpu_custom_call.1} parent=1 // pred_region
      %vm18 = vcmask 0
      %19 = vst.msk [vmem:[#allocation3] sm:$0x1] %vm18, 0.0
    $region13: #{tpu_custom_call.1} parent=1 // pred_fallthru
      _
    // Predicated region
    $region14: #{tpu_custom_call.1} parent=1 // pred_check
      %p20 = pneg %p13
    $region15: #{tpu_custom_call.1} parent=1 // pred_check_branch
      %22 = sbr.rel (%p20) target = $region17
    $region16: #{tpu_custom_call.1} parent=1 // pred_region
      %vm23 = vcmask 7168
      %24 = vst.msk [vmem:[#allocation2] sm:$0xff] %vm23, 0.0
    $region17: #{tpu_custom_call.1} parent=1 // pred_fallthru
      _
    %v25 = vld [vmem:[%s0] sm:$0xff]
    %v26 = vld [vmem:[%s1] sm:$0xff]
    %v27 = vlaneseq
    %v28 = vand.u32 %v27, 127
    %s29 = smul.u32 0, 32
    %v30 = vstv %s29
    %v31 = vadd.s32 %v28, %v30
    %32 = vset.pattern.permute.xlu0 0
    %33 = vperm.xlu0 %32, %v26
    %v34 = vpop.permute.xlu0 %33
    %vm35 = vcmp.eq.s32.totalorder %v31, %v34
    %v36 = vld [vmem:[#allocation2] sm:$0xff]
    %v37 = vsel %vm35, %v25, 0.0
    %vm38 = vcmask 261120
    %v39 = vsel %vm38, %v37, 0.0
    %40 = vadd.xlane.f32.xlu0 %v39
    %v41 = vpop.xlane.xlu0 %40
    %v42 = vadd.f32 %v36, %v41
    %vm43 = vcmask 7168
    %44 = vst.msk [vmem:[#allocation2] sm:$0xff] %vm43, %v42
    // Predicated region
    $region18: #{tpu_custom_call.1} parent=1 // pred_check
      %p45 = pneg %p13
    $region19: #{tpu_custom_call.1} parent=1 // pred_check_branch
      %47 = sbr.rel (%p45) target = $region21
    $region20: #{tpu_custom_call.1} parent=1 // pred_region
      %v48 = vlaneseq
      %v49 = vshrl.u32 %v48, 7
      %s50 = smul.u32 0, 8
      %v51 = vstv %s50
      %v52 = vadd.s32 %v49, %v51
      %vm53 = vcmp.lt.s32.totalorder %v52, 8
      %v54 = vld [vmem:[#allocation2] sm:$0xff]
      %v55 = vsel %vm53, %v54, 1.0
      %v56 = vld [vmem:[#allocation3] sm:$0x1]
      %v57 = vlog2.pop %v55
      %v58 = vmul.f32 %v57, 0.6931472
      %v59 = vsel %vm43, %v58, 0.0
      %60 = vadd.xlane.f32.xlu0 %v59
      %v61 = vpop.xlane.xlu0 %60
      %v62 = vrot.slane %v61, 4
      %v63 = vadd.f32 %v61, %v62
      %v64 = vrot.slane %v63, 2
      %v65 = vadd.f32 %v63, %v64
      %v66 = vrot.slane %v65, 1
      %v67 = vadd.f32 %v65, %v66
      %s68 = vtos %v67
      %v69 = vstv %s68
      %v70 = vadd.f32 %v56, %v69
      %vm71 = vcmask 0
      %72 = vst.msk [vmem:[#allocation3] sm:$0x1] %vm71, %v70
    $region21: #{tpu_custom_call.1} parent=1 // pred_fallthru
      _
    // Predicated region
    $region22: #{tpu_custom_call.1} parent=1 // pred_check
      _
    $region23: #{tpu_custom_call.1} parent=1 // pred_check_branch
      %74 = sbr.rel (%p14) target = $region25
    $region24: #{tpu_custom_call.1} parent=1 // pred_region
      %v75 = vld [vmem:[#allocation3] sm:$0x1]
      %v76 = vmul.f32 %v75, -0.125
      %vm77 = vcmask 0
      %78 = vst.msk [vmem:[#allocation3] sm:$0x1] %vm77, %v76
    $region25: #{tpu_custom_call.1} parent=1 // pred_fallthru
      _
    // Predicated region
    $region26: #{tpu_custom_call.1} parent=1 // pred_check
      _
    $region27: #{tpu_custom_call.1} parent=1 // pred_check_branch
      %80 = sbr.rel (0) target = $region29
    $region28: #{tpu_custom_call.1} parent=1 // pred_region
      %s82 = ssub.s32 16, 16
      %83 = vsyncadd [#allocation4], %s82
      %s85 = sshll.u32 [#allocation3], 4
      %s86 = int_to_ptr.vmem [resolvable:$true] %s85
      %88 = dma.vmem_to_hbm [thread:$0]  %s86, 16, %s2, [#allocation4]
    $region29: #{tpu_custom_call.1} parent=1 // pred_fallthru
      _
    // Predicated region
    $region30: #{tpu_custom_call.1} parent=1 // pred_check
      _
    $region31: #{tpu_custom_call.1} parent=1 // pred_check_branch
      %90 = sbr.rel (0) target = $region33
    $region32: #{tpu_custom_call.1} parent=1 // pred_region
      %91 = dma.done [#allocation4], 16
    $region33: #{tpu_custom_call.1} parent=1 // pred_fallthru
      _
    %92 = vsyncpa [#allocation4], 1

</llo_original>
